<compile_context>
chip_gen: v6e
topology: v6e:2x2x1
jax: 0.10.0
libtpu: 0.0.40
codegen_flags: <defaults>
</compile_context>

<pallas_src>
import functools

import jax
import jax.numpy as jnp
from jax.experimental import pallas as pl
from jax.experimental.pallas import tpu as pltpu

_LANES = 128  # pad output feature dim to full lane width for unmasked stores


def _mlr_kernel(x_ref, w_ref, b_ref, o_ref):
    """Single fused affine transform.

    x_ref : (B, D)      float32   (concatenated, flattened activations)
    w_ref : (D, O_pad)  float32   (pre-padded transposed Linear weight)
    b_ref : (1, O_pad)  float32
    o_ref : (B, O_pad)  float32   (lane-dense padded output)
    """
    o_ref[...] = (
        jnp.dot(
            x_ref[...],
            w_ref[...],
            preferred_element_type=jnp.float32,
            precision=jax.lax.Precision.HIGHEST,
        )
        + b_ref[...]
    )


def _mlr_linear_pallas(x_flat, weight_pad, bias_pad):
    """One pallas_call, no grid: whole (tiny) problem resident in VMEM."""
    b = x_flat.shape[0]
    o_pad = weight_pad.shape[1]
    vmem = pl.BlockSpec(memory_space=pltpu.MemorySpace.VMEM)
    return pl.pallas_call(
        _mlr_kernel,
        out_shape=jax.ShapeDtypeStruct((b, o_pad), jnp.float32),
        in_specs=[vmem, vmem, vmem],
        out_specs=vmem,
    )(x_flat, weight_pad, bias_pad)


@functools.partial(jax.jit, static_argnames=("pred_sequence_length", "output_size"))
def _mlr_forward(parts, weight_pad, bias_pad, *, pred_sequence_length, output_size):
    """Fully-jitted forward: flatten/cast + concat + kernel + slice + reshape."""
    batch = parts[0].shape[0]
    flat = [p.reshape(batch, -1).astype(jnp.float32) for p in parts]
    x = flat[0] if len(flat) == 1 else jnp.concatenate(flat, axis=1)
    out_features = pred_sequence_length * output_size
    out_pad = _mlr_linear_pallas(x, weight_pad, bias_pad)
    out = out_pad[:, :out_features]
    return out.reshape(batch, pred_sequence_length, output_size)


class MLRPallas:
    """Deterministically-initialized JAX/Pallas port of satprod MLR."""

    def __init__(self, sequence_length, num_past_features, num_forecast_features,
                 output_size=1, pred_sequence_length=5, key=None):
        self.sequence_length = sequence_length
        self.num_past_features = num_past_features
        self.num_forecast_features = num_forecast_features
        self.input_size = sequence_length * num_past_features + num_forecast_features
        self.output_size = output_size
        self.pred_sequence_length = pred_sequence_length
        self.out_features = output_size * pred_sequence_length
        self.out_features_padded = max(
            _LANES, ((self.out_features + _LANES - 1) // _LANES) * _LANES)

        if key is None:
            key = jax.random.PRNGKey(0)
        kw, kb = jax.random.split(key)
        # nn.Linear default init: U(-1/sqrt(fan_in), 1/sqrt(fan_in)).
        bound = 1.0 / float(self.input_size) ** 0.5
        # Kernel layout: (D, O) = transpose of nn.Linear's (O, D).
        w = jax.random.uniform(kw, (self.input_size, self.out_features),
                               jnp.float32, -bound, bound)
        b = jax.random.uniform(kb, (1, self.out_features),
                               jnp.float32, -bound, bound)
        pad_cols = self.out_features_padded - self.out_features
        # Padded once at construction (review: no per-call weight re-slicing).
        self.weight_pad = jnp.pad(w, ((0, 0), (0, pad_cols)))
        self.bias_pad = jnp.pad(b, ((0, 0), (0, pad_cols)))

    def __call__(self, data_dict):
        x_prod = data_dict.get('X_prod', None)
        x_weather = data_dict.get('X_weather', None)
        x_fc = data_dict.get('X_weather_forecasts', None)

        # Mirror the PyTorch module's nested None-handling exactly (including
        # silently dropping forecasts when weather is None but prod is present).
        parts = []
        if x_prod is not None:
            batch_size = x_prod.shape[0]
            parts.append(x_prod)
            if x_weather is not None:
                parts.append(x_weather)
                if x_fc is not None:
                    parts.append(x_fc)
        elif x_weather is not None:
            batch_size = x_weather.shape[0]
            parts.append(x_weather)
            if x_fc is not None:
                parts.append(x_fc)
        else:
            raise Exception(
                'MLR needs either production, wind speed or wind direction to function.')

        total = sum(int(jnp.size(p)) // batch_size for p in parts)
        if total != self.input_size:
            raise ValueError(
                f'Flattened feature dim {total} does not match '
                f'input_size {self.input_size} used to build the weight.')

        return _mlr_forward(
            tuple(parts), self.weight_pad, self.bias_pad,
            pred_sequence_length=self.pred_sequence_length,
            output_size=self.output_size)


if __name__ == "__main__":
    # Small synthetic shapes consistent with the module:
    #   sequence_length=8, num_past_features=4 (prod contributes 1, weather 3),
    #   num_forecast_features=12, output_size=1, pred_sequence_length=5, batch=2
    B = 2
    seq_len = 8
    prod_feats, weather_feats = 1, 3
    num_past_features = prod_feats + weather_feats
    num_forecast_features = 12

    key = jax.random.PRNGKey(0)
    k1, k2, k3, kparams = jax.random.split(key, 4)
    data_dict = {
        'X_prod': jax.random.normal(k1, (B, seq_len, prod_feats), jnp.float32),
        'X_weather': jax.random.normal(k2, (B, seq_len, weather_feats), jnp.float32),
        'X_weather_forecasts': jax.random.normal(
            k3, (B, num_forecast_features), jnp.float32),
    }

    model = MLRPallas(
        sequence_length=seq_len,
        num_past_features=num_past_features,
        num_forecast_features=num_forecast_features,
        output_size=1,
        pred_sequence_length=5,
        key=kparams,
    )

    out = model(data_dict)
    jax.block_until_ready(out)
    assert out.shape == (B, 5, 1)

    # Reference in plain JAX at full f32 precision (matches the kernel's
    # precision=HIGHEST matmul path).
    x_flat = jnp.concatenate(
        [data_dict['X_prod'].reshape(B, -1),
         data_dict['X_weather'].reshape(B, -1),
         data_dict['X_weather_forecasts'].reshape(B, -1)], axis=1)
    w = model.weight_pad[:, :model.out_features]
    bias = model.bias_pad[:, :model.out_features]
    ref = (jnp.dot(x_flat, w, precision=jax.lax.Precision.HIGHEST) + bias
           ).reshape(B, 5, 1)
    max_err = float(jnp.max(jnp.abs(out - ref)))
    assert jnp.allclose(out, ref, atol=1e-5, rtol=1e-5), f"max abs err = {max_err}"

    print("KERNEL_OK")
</pallas_src>

<mosaic_0001>
module attributes {stable_mosaic.version = 11 : i64} {
  func.func @_mlr_kernel(%arg0: memref<2x44xf32, #tpu.memory_space<vmem>>, %arg1: memref<44x128xf32, #tpu.memory_space<vmem>>, %arg2: memref<1x128xf32, #tpu.memory_space<vmem>>, %arg3: memref<2x128xf32, #tpu.memory_space<vmem>>) attributes {dimension_semantics = [], scalar_prefetch = 0 : i64, scratch_operands = 0 : i64, tpu.core_type = #tpu.core_type<tc>} {
    %c0 = arith.constant 0 : index
    %c0_0 = arith.constant 0 : index
    %0 = vector.load %arg0[%c0, %c0_0] : memref<2x44xf32, #tpu.memory_space<vmem>>, vector<2x44xf32>
    %c0_1 = arith.constant 0 : index
    %c0_2 = arith.constant 0 : index
    %1 = vector.load %arg1[%c0_1, %c0_2] : memref<44x128xf32, #tpu.memory_space<vmem>>, vector<44x128xf32>
    %cst = arith.constant dense<0.000000e+00> : vector<2x128xf32>
    %2 = tpu.matmul %0, %1, %cst {dimension_numbers = #tpu.dot_dimension_numbers<[1], [0], [0], [1], [0, 0, 1, 1], [], []>, precision = #tpu.contract_precision<fp32>} : vector<2x44xf32>, vector<44x128xf32>, vector<2x128xf32> -> vector<2x128xf32>
    %c0_3 = arith.constant 0 : index
    %c0_4 = arith.constant 0 : index
    %3 = vector.load %arg2[%c0_3, %c0_4] : memref<1x128xf32, #tpu.memory_space<vmem>>, vector<1x128xf32>
    %4 = vector.broadcast %3 : vector<1x128xf32> to vector<2x128xf32>
    %5 = arith.addf %2, %4 : vector<2x128xf32>
    %c0_5 = arith.constant 0 : index
    %c0_6 = arith.constant 0 : index
    %6 = vector.load %arg3[%c0_5, %c0_6] : memref<2x128xf32, #tpu.memory_space<vmem>>, vector<2x128xf32>
    tpu.vector_store %arg3[%c0_5, %c0_6], %5 {strides = array<i32>} : memref<2x128xf32, #tpu.memory_space<vmem>>, vector<2x128xf32>,
    return
  }
}

</mosaic_0001>

<llo_original>
// kernel: _mlr_forward.1
$region0: #{_mlr_forward.1}
  #allocation0 [shape = 'u32[]', space=smem, size = 0x4, offset = 0x4, fixed_abs, tag = 'smem constant byte address 0x4 - core index']
  #allocation1 [shape = 'u32[144,128]{1,0:T(1,128)}', space=vmem, size = 0x12000, scoped, tag = 'internal scratch']
  %s0 = inlined_call_operand.vmem [shape: f32[2,44], index: 0, kind: input, shape index: {}]
  %s1 = inlined_call_operand.vmem [shape: f32[44,128], index: 1, kind: input, shape index: {}]
  %s2 = inlined_call_operand.vmem [shape: f32[1,128], index: 2, kind: input, shape index: {}]
  %s3 = inlined_call_operand.hbm [shape: f32[2,128], index: 3, kind: output, shape index: {}]
  %s4 = sld [smem:[#allocation0]]
  $region22: #{_mlr_forward.1} parent=0
    _
  %s6 = ssub.s32 1, %s4
  %s7 = scalar_select 0, %s6, %s4
  $region1: #{_mlr_forward.1} parent=0
    #allocation2 [shape = 'u8[1024]{0}', space=vmem, size = 0x400, scoped, tag = 'output window, operand 0, single buffered']
    #allocation3 [shape = 's32[1]{0}', space=sflag, size = 0x4, scoped, tag = 'scoped memory for _mlr_forward.1']
    %8 = vsyncpa [#allocation3], 0
    // Predicated region
    $region2: #{_mlr_forward.1} parent=1 // pred_check
      _
    $region3: #{_mlr_forward.1} parent=1 // pred_check_branch
      %10 = sbr.rel (0) target = $region5
    $region4: #{_mlr_forward.1} parent=1 // pred_region
      _
    $region5: #{_mlr_forward.1} parent=1 // pred_fallthru
      _
    // Predicated region
    $region6: #{_mlr_forward.1} parent=1 // pred_check
      _
    $region7: #{_mlr_forward.1} parent=1 // pred_check_branch
      %12 = sbr.rel (0) target = $region9
    $region8: #{_mlr_forward.1} parent=1 // pred_region
      _
    $region9: #{_mlr_forward.1} parent=1 // pred_fallthru
      _
    // Predicated region
    $region10: #{_mlr_forward.1} parent=1 // pred_check
      _
    $region11: #{_mlr_forward.1} parent=1 // pred_check_branch
      %14 = sbr.rel (0) target = $region13
    $region12: #{_mlr_forward.1} parent=1 // pred_region
      _
    $region13: #{_mlr_forward.1} parent=1 // pred_fallthru
      _
    %v15 = vld [vmem:[%s0] sm:$0x3]
    %v16 = vld [vmem:[%s1] sm:$0xff]
    %v17 = vld [vmem:[%s1 + $0x8] sm:$0xff]
    %v18 = vld [vmem:[%s1 + $0x10] sm:$0xff]
    %v19 = vld [vmem:[%s1 + $0x18] sm:$0xff]
    %v20 = vld [vmem:[%s1 + $0x20] sm:$0xff]
    %v21 = vld [vmem:[%s1 + $0x28] sm:$0xf]
    %v22 = vld [vmem:[%s2] sm:$0x1]
    %v24 = vlaneseq
    %v25 = vshrl.u32 %v24, 7
    %v26 = vsub.s32 0, %v25
    %v27 = vrot.slane %v22, %v26
    %vm29 = vcmask 359424
    %v31 = vsel %vm29, %v15, 0
    %vm33 = vcmask 1043456
    %v35 = vsel %vm33, %v21, 0
    %37 = vmatprep.subr.mxu0 0.0
    %38 = vmatpush1.msra.mxu0 0.0
    %39 = vmatprep.subr.mxu0 0.0
    %40 = vmatpush1.msra.mxu0 0.0
    %41 = vmatprep.subr.mxu0 0.0
    %42 = vmatpush1.msra.mxu0 0.0
    %43 = vmatprep.subr.mxu0 0.0
    %44 = vmatpush1.msra.mxu0 0.0
    %45 = vmatprep.subr.mxu0 0.0
    %46 = vmatpush1.msra.mxu0 0.0
    %47 = vmatprep.subr.mxu0 0.0
    %48 = vmatpush1.msra.mxu0 0.0
    %49 = vmatprep.subr.mxu0 0.0
    %50 = vmatpush1.msra.mxu0 0.0
    %51 = vmatprep.subr.mxu0 0.0
    %52 = vmatpush1.msra.mxu0 0.0
    %53 = vmatprep.subr.mxu0 0.0
    %54 = vmatpush1.msra.mxu0 0.0
    %55 = vmatprep.subr.mxu0 0.0
    %56 = vmatpush1.msra.mxu0 0.0
    %57 = vmatprep.subr.mxu0 0.0
    %v58 = vand.u32 %v35, 4294901760
    %59 = vmatpush1.msra.mxu0 %v58
    %60 = vmatprep.subr.mxu0 0.0
    %v61 = vand.u32 %v20, 4294901760
    %62 = vmatpush1.msra.mxu0 %v61
    %63 = vmatprep.subr.mxu0 0.0
    %v64 = vand.u32 %v19, 4294901760
    %65 = vmatpush1.msra.mxu0 %v64
    %66 = vmatprep.subr.mxu0 0.0
    %v67 = vand.u32 %v18, 4294901760
    %68 = vmatpush1.msra.mxu0 %v67
    %69 = vmatprep.subr.mxu0 0.0
    %v70 = vand.u32 %v17, 4294901760
    %71 = vmatpush1.msra.mxu0 %v70
    %72 = vmatprep.subr.mxu0 0.0
    %v73 = vand.u32 %v16, 4294901760
    %74 = vmatpush1.msra.mxu0 %v73
    %75 = vmatprep.subr.mxu0 0.0
    %76 = vmatpush2.msra.mxu0 0.0
    %77 = vmatprep.subr.mxu0 0.0
    %78 = vmatpush2.msra.mxu0 0.0
    %79 = vmatprep.subr.mxu0 0.0
    %80 = vmatpush2.msra.mxu0 0.0
    %81 = vmatprep.subr.mxu0 0.0
    %82 = vmatpush2.msra.mxu0 0.0
    %83 = vmatprep.subr.mxu0 0.0
    %84 = vmatpush2.msra.mxu0 0.0
    %85 = vmatprep.subr.mxu0 0.0
    %86 = vmatpush2.msra.mxu0 0.0
    %87 = vmatprep.subr.mxu0 0.0
    %88 = vmatpush2.msra.mxu0 0.0
    %89 = vmatprep.subr.mxu0 0.0
    %90 = vmatpush2.msra.mxu0 0.0
    %91 = vmatprep.subr.mxu0 0.0
    %92 = vmatpush2.msra.mxu0 0.0
    %93 = vmatprep.subr.mxu0 0.0
    %94 = vmatpush2.msra.mxu0 0.0
    %95 = vmatprep.subr.mxu0 0.0
    %96 = vmatpush2.msra.mxu0 0.0
    %97 = vmatprep.subr.mxu0 0.0
    %98 = vmatpush2.msra.mxu0 0.0
    %99 = vmatprep.subr.mxu0 0.0
    %100 = vmatpush2.msra.mxu0 0.0
    %101 = vmatprep.subr.mxu0 0.0
    %102 = vmatpush2.msra.mxu0 0.0
    %103 = vmatprep.subr.mxu0 0.0
    %104 = vmatpush2.msra.mxu0 0.0
    %105 = vmatprep.subr.mxu0 0.0
    %106 = vmatpush2.msra.mxu0 0.0
    %107 = vmatprep.mubr.f32.mxu0 0.0
    %v108 = vand.u32 %v31, 4294901760
    %v109 = vsub.f32 %v31, %v108
    %v110 = vand.u32 %v109, 4294901760
    %v111 = vsub.f32 %v109, %v110
    %v112 = vand.u32 %v111, 4294901760
    %113 = vmatmul.mubr.f32.gmra.mxu0 %v112
    %v114 = vpop.f32.mrf.mxu0
    %v115 = vadd.f32 %v27, %v114
    %v116 = vpop.f32.mrf.mxu0
    %117 = vdwg.mxu0
    %118 = vmatprep.subr.mxu0 0.0
    %119 = vmatpush1.msra.mxu0 0.0
    %120 = vmatprep.subr.mxu0 0.0
    %121 = vmatpush1.msra.mxu0 0.0
    %122 = vmatprep.subr.mxu0 0.0
    %123 = vmatpush1.msra.mxu0 0.0
    %124 = vmatprep.subr.mxu0 0.0
    %125 = vmatpush1.msra.mxu0 0.0
    %126 = vmatprep.subr.mxu0 0.0
    %127 = vmatpush1.msra.mxu0 0.0
    %128 = vmatprep.subr.mxu0 0.0
    %129 = vmatpush1.msra.mxu0 0.0
    %130 = vmatprep.subr.mxu0 0.0
    %131 = vmatpush1.msra.mxu0 0.0
    %132 = vmatprep.subr.mxu0 0.0
    %133 = vmatpush1.msra.mxu0 0.0
    %134 = vmatprep.subr.mxu0 0.0
    %135 = vmatpush1.msra.mxu0 0.0
    %136 = vmatprep.subr.mxu0 0.0
    %137 = vmatpush1.msra.mxu0 0.0
    %138 = vmatprep.subr.mxu0 0.0
    %v139 = vand.u32 %v35, 4294901760
    %v140 = vsub.f32 %v35, %v139
    %v141 = vand.u32 %v140, 4294901760
    %v142 = vsub.f32 %v140, %v141
    %v143 = vand.u32 %v142, 4294901760
    %144 = vmatpush1.msra.mxu0 %v143
    %145 = vmatprep.subr.mxu0 0.0
    %v146 = vand.u32 %v20, 4294901760
    %v147 = vsub.f32 %v20, %v146
    %v148 = vand.u32 %v147, 4294901760
    %v149 = vsub.f32 %v147, %v148
    %v150 = vand.u32 %v149, 4294901760
    %151 = vmatpush1.msra.mxu0 %v150
    %152 = vmatprep.subr.mxu0 0.0
    %v153 = vand.u32 %v19, 4294901760
    %v154 = vsub.f32 %v19, %v153
    %v155 = vand.u32 %v154, 4294901760
    %v156 = vsub.f32 %v154, %v155
    %v157 = vand.u32 %v156, 4294901760
    %158 = vmatpush1.msra.mxu0 %v157
    %159 = vmatprep.subr.mxu0 0.0
    %v160 = vand.u32 %v18, 4294901760
    %v161 = vsub.f32 %v18, %v160
    %v162 = vand.u32 %v161, 4294901760
    %v163 = vsub.f32 %v161, %v162
    %v164 = vand.u32 %v163, 4294901760
    %165 = vmatpush1.msra.mxu0 %v164
    %166 = vmatprep.subr.mxu0 0.0
    %v167 = vand.u32 %v17, 4294901760
    %v168 = vsub.f32 %v17, %v167
    %v169 = vand.u32 %v168, 4294901760
    %v170 = vsub.f32 %v168, %v169
    %v171 = vand.u32 %v170, 4294901760
    %172 = vmatpush1.msra.mxu0 %v171
    %173 = vmatprep.subr.mxu0 0.0
    %v174 = vand.u32 %v16, 4294901760
    %v175 = vsub.f32 %v16, %v174
    %v176 = vand.u32 %v175, 4294901760
    %v177 = vsub.f32 %v175, %v176
    %v178 = vand.u32 %v177, 4294901760
    %179 = vmatpush1.msra.mxu0 %v178
    %180 = vmatprep.subr.mxu0 0.0
    %181 = vmatpush2.msra.mxu0 0.0
    %182 = vmatprep.subr.mxu0 0.0
    %183 = vmatpush2.msra.mxu0 0.0
    %184 = vmatprep.subr.mxu0 0.0
    %185 = vmatpush2.msra.mxu0 0.0
    %186 = vmatprep.subr.mxu0 0.0
    %187 = vmatpush2.msra.mxu0 0.0
    %188 = vmatprep.subr.mxu0 0.0
    %189 = vmatpush2.msra.mxu0 0.0
    %190 = vmatprep.subr.mxu0 0.0
    %191 = vmatpush2.msra.mxu0 0.0
    %192 = vmatprep.subr.mxu0 0.0
    %193 = vmatpush2.msra.mxu0 0.0
    %194 = vmatprep.subr.mxu0 0.0
    %195 = vmatpush2.msra.mxu0 0.0
    %196 = vmatprep.subr.mxu0 0.0
    %197 = vmatpush2.msra.mxu0 0.0
    %198 = vmatprep.subr.mxu0 0.0
    %199 = vmatpush2.msra.mxu0 0.0
    %200 = vmatprep.subr.mxu0 0.0
    %201 = vmatpush2.msra.mxu0 0.0
    %202 = vmatprep.subr.mxu0 0.0
    %203 = vmatpush2.msra.mxu0 0.0
    %204 = vmatprep.subr.mxu0 0.0
    %205 = vmatpush2.msra.mxu0 0.0
    %206 = vmatprep.subr.mxu0 0.0
    %207 = vmatpush2.msra.mxu0 0.0
    %208 = vmatprep.subr.mxu0 0.0
    %209 = vmatpush2.msra.mxu0 0.0
    %210 = vmatprep.subr.mxu0 0.0
    %211 = vmatpush2.msra.mxu0 0.0
    %212 = vmatprep.mubr.f32.mxu0 0.0
    %v213 = vand.u32 %v31, 4294901760
    %214 = vmatmul.mubr.f32.gmra.mxu0 %v213
    %v215 = vpop.f32.mrf.mxu0
    %v216 = vadd.f32 %v115, %v215
    %v217 = vpop.f32.mrf.mxu0
    %218 = vdwg.mxu0
    %219 = vmatprep.subr.mxu0 0.0
    %220 = vmatpush1.msra.mxu0 0.0
    %221 = vmatprep.subr.mxu0 0.0
    %222 = vmatpush1.msra.mxu0 0.0
    %223 = vmatprep.subr.mxu0 0.0
    %224 = vmatpush1.msra.mxu0 0.0
    %225 = vmatprep.subr.mxu0 0.0
    %226 = vmatpush1.msra.mxu0 0.0
    %227 = vmatprep.subr.mxu0 0.0
    %228 = vmatpush1.msra.mxu0 0.0
    %229 = vmatprep.subr.mxu0 0.0
    %230 = vmatpush1.msra.mxu0 0.0
    %231 = vmatprep.subr.mxu0 0.0
    %232 = vmatpush1.msra.mxu0 0.0
    %233 = vmatprep.subr.mxu0 0.0
    %234 = vmatpush1.msra.mxu0 0.0
    %235 = vmatprep.subr.mxu0 0.0
    %236 = vmatpush1.msra.mxu0 0.0
    %237 = vmatprep.subr.mxu0 0.0
    %238 = vmatpush1.msra.mxu0 0.0
    %239 = vmatprep.subr.mxu0 0.0
    %v240 = vand.u32 %v35, 4294901760
    %v241 = vsub.f32 %v35, %v240
    %242 = vmatpush1.msra.mxu0 %v241
    %243 = vmatprep.subr.mxu0 0.0
    %v244 = vand.u32 %v20, 4294901760
    %v245 = vsub.f32 %v20, %v244
    %246 = vmatpush1.msra.mxu0 %v245
    %247 = vmatprep.subr.mxu0 0.0
    %v248 = vand.u32 %v19, 4294901760
    %v249 = vsub.f32 %v19, %v248
    %250 = vmatpush1.msra.mxu0 %v249
    %251 = vmatprep.subr.mxu0 0.0
    %v252 = vand.u32 %v18, 4294901760
    %v253 = vsub.f32 %v18, %v252
    %254 = vmatpush1.msra.mxu0 %v253
    %255 = vmatprep.subr.mxu0 0.0
    %v256 = vand.u32 %v17, 4294901760
    %v257 = vsub.f32 %v17, %v256
    %258 = vmatpush1.msra.mxu0 %v257
    %259 = vmatprep.subr.mxu0 0.0
    %v260 = vand.u32 %v16, 4294901760
    %v261 = vsub.f32 %v16, %v260
    %262 = vmatpush1.msra.mxu0 %v261
    %263 = vmatprep.subr.mxu0 0.0
    %264 = vmatpush2.msra.mxu0 0.0
    %265 = vmatprep.subr.mxu0 0.0
    %266 = vmatpush2.msra.mxu0 0.0
    %267 = vmatprep.subr.mxu0 0.0
    %268 = vmatpush2.msra.mxu0 0.0
    %269 = vmatprep.subr.mxu0 0.0
    %270 = vmatpush2.msra.mxu0 0.0
    %271 = vmatprep.subr.mxu0 0.0
    %272 = vmatpush2.msra.mxu0 0.0
    %273 = vmatprep.subr.mxu0 0.0
    %274 = vmatpush2.msra.mxu0 0.0
    %275 = vmatprep.subr.mxu0 0.0
    %276 = vmatpush2.msra.mxu0 0.0
    %277 = vmatprep.subr.mxu0 0.0
    %278 = vmatpush2.msra.mxu0 0.0
    %279 = vmatprep.subr.mxu0 0.0
    %280 = vmatpush2.msra.mxu0 0.0
    %281 = vmatprep.subr.mxu0 0.0
    %282 = vmatpush2.msra.mxu0 0.0
    %283 = vmatprep.subr.mxu0 0.0
    %284 = vmatpush2.msra.mxu0 0.0
    %285 = vmatprep.subr.mxu0 0.0
    %286 = vmatpush2.msra.mxu0 0.0
    %287 = vmatprep.subr.mxu0 0.0
    %288 = vmatpush2.msra.mxu0 0.0
    %289 = vmatprep.subr.mxu0 0.0
    %290 = vmatpush2.msra.mxu0 0.0
    %291 = vmatprep.subr.mxu0 0.0
    %292 = vmatpush2.msra.mxu0 0.0
    %293 = vmatprep.subr.mxu0 0.0
    %294 = vmatpush2.msra.mxu0 0.0
    %295 = vmatprep.mubr.f32.mxu0 0.0
    %v296 = vand.u32 %v31, 4294901760
    %v297 = vsub.f32 %v31, %v296
    %298 = vmatmul.mubr.f32.gmra.mxu0 %v297
    %v299 = vpop.f32.mrf.mxu0
    %v300 = vadd.f32 %v216, %v299
    %v301 = vpop.f32.mrf.mxu0
    %302 = vdwg.mxu0
    %303 = vmatprep.subr.mxu0 0.0
    %304 = vmatpush1.msra.mxu0 0.0
    %305 = vmatprep.subr.mxu0 0.0
    %306 = vmatpush1.msra.mxu0 0.0
    %307 = vmatprep.subr.mxu0 0.0
    %308 = vmatpush1.msra.mxu0 0.0
    %309 = vmatprep.subr.mxu0 0.0
    %310 = vmatpush1.msra.mxu0 0.0
    %311 = vmatprep.subr.mxu0 0.0
    %312 = vmatpush1.msra.mxu0 0.0
    %313 = vmatprep.subr.mxu0 0.0
    %314 = vmatpush1.msra.mxu0 0.0
    %315 = vmatprep.subr.mxu0 0.0
    %316 = vmatpush1.msra.mxu0 0.0
    %317 = vmatprep.subr.mxu0 0.0
    %318 = vmatpush1.msra.mxu0 0.0
    %319 = vmatprep.subr.mxu0 0.0
    %320 = vmatpush1.msra.mxu0 0.0
    %321 = vmatprep.subr.mxu0 0.0
    %322 = vmatpush1.msra.mxu0 0.0
    %323 = vmatprep.subr.mxu0 0.0
    %v324 = vand.u32 %v35, 4294901760
    %325 = vmatpush1.msra.mxu0 %v324
    %326 = vmatprep.subr.mxu0 0.0
    %v327 = vand.u32 %v20, 4294901760
    %328 = vmatpush1.msra.mxu0 %v327
    %329 = vmatprep.subr.mxu0 0.0
    %v330 = vand.u32 %v19, 4294901760
    %331 = vmatpush1.msra.mxu0 %v330
    %332 = vmatprep.subr.mxu0 0.0
    %v333 = vand.u32 %v18, 4294901760
    %334 = vmatpush1.msra.mxu0 %v333
    %335 = vmatprep.subr.mxu0 0.0
    %v336 = vand.u32 %v17, 4294901760
    %337 = vmatpush1.msra.mxu0 %v336
    %338 = vmatprep.subr.mxu0 0.0
    %v339 = vand.u32 %v16, 4294901760
    %340 = vmatpush1.msra.mxu0 %v339
    %341 = vmatprep.subr.mxu0 0.0
    %342 = vmatpush2.msra.mxu0 0.0
    %343 = vmatprep.subr.mxu0 0.0
    %344 = vmatpush2.msra.mxu0 0.0
    %345 = vmatprep.subr.mxu0 0.0
    %346 = vmatpush2.msra.mxu0 0.0
    %347 = vmatprep.subr.mxu0 0.0
    %348 = vmatpush2.msra.mxu0 0.0
    %349 = vmatprep.subr.mxu0 0.0
    %350 = vmatpush2.msra.mxu0 0.0
    %351 = vmatprep.subr.mxu0 0.0
    %352 = vmatpush2.msra.mxu0 0.0
    %353 = vmatprep.subr.mxu0 0.0
    %354 = vmatpush2.msra.mxu0 0.0
    %355 = vmatprep.subr.mxu0 0.0
    %356 = vmatpush2.msra.mxu0 0.0
    %357 = vmatprep.subr.mxu0 0.0
    %358 = vmatpush2.msra.mxu0 0.0
    %359 = vmatprep.subr.mxu0 0.0
    %360 = vmatpush2.msra.mxu0 0.0
    %361 = vmatprep.subr.mxu0 0.0
    %362 = vmatpush2.msra.mxu0 0.0
    %363 = vmatprep.subr.mxu0 0.0
    %364 = vmatpush2.msra.mxu0 0.0
    %365 = vmatprep.subr.mxu0 0.0
    %366 = vmatpush2.msra.mxu0 0.0
    %367 = vmatprep.subr.mxu0 0.0
    %368 = vmatpush2.msra.mxu0 0.0
    %369 = vmatprep.subr.mxu0 0.0
    %370 = vmatpush2.msra.mxu0 0.0
    %371 = vmatprep.subr.mxu0 0.0
    %372 = vmatpush2.msra.mxu0 0.0
    %373 = vmatprep.mubr.f32.mxu0 0.0
    %v374 = vand.u32 %v31, 4294901760
    %v375 = vsub.f32 %v31, %v374
    %v376 = vand.u32 %v375, 4294901760
    %377 = vmatmul.mubr.f32.gmra.mxu0 %v376
    %v378 = vpop.f32.mrf.mxu0
    %v379 = vadd.f32 %v300, %v378
    %v380 = vpop.f32.mrf.mxu0
    %381 = vdwg.mxu0
    %382 = vmatprep.subr.mxu0 0.0
    %383 = vmatpush1.msra.mxu0 0.0
    %384 = vmatprep.subr.mxu0 0.0
    %385 = vmatpush1.msra.mxu0 0.0
    %386 = vmatprep.subr.mxu0 0.0
    %387 = vmatpush1.msra.mxu0 0.0
    %388 = vmatprep.subr.mxu0 0.0
    %389 = vmatpush1.msra.mxu0 0.0
    %390 = vmatprep.subr.mxu0 0.0
    %391 = vmatpush1.msra.mxu0 0.0
    %392 = vmatprep.subr.mxu0 0.0
    %393 = vmatpush1.msra.mxu0 0.0
    %394 = vmatprep.subr.mxu0 0.0
    %395 = vmatpush1.msra.mxu0 0.0
    %396 = vmatprep.subr.mxu0 0.0
    %397 = vmatpush1.msra.mxu0 0.0
    %398 = vmatprep.subr.mxu0 0.0
    %399 = vmatpush1.msra.mxu0 0.0
    %400 = vmatprep.subr.mxu0 0.0
    %401 = vmatpush1.msra.mxu0 0.0
    %402 = vmatprep.subr.mxu0 0.0
    %v403 = vand.u32 %v35, 4294901760
    %v404 = vsub.f32 %v35, %v403
    %v405 = vand.u32 %v404, 4294901760
    %406 = vmatpush1.msra.mxu0 %v405
    %407 = vmatprep.subr.mxu0 0.0
    %v408 = vand.u32 %v20, 4294901760
    %v409 = vsub.f32 %v20, %v408
    %v410 = vand.u32 %v409, 4294901760
    %411 = vmatpush1.msra.mxu0 %v410
    %412 = vmatprep.subr.mxu0 0.0
    %v413 = vand.u32 %v19, 4294901760
    %v414 = vsub.f32 %v19, %v413
    %v415 = vand.u32 %v414, 4294901760
    %416 = vmatpush1.msra.mxu0 %v415
    %417 = vmatprep.subr.mxu0 0.0
    %v418 = vand.u32 %v18, 4294901760
    %v419 = vsub.f32 %v18, %v418
    %v420 = vand.u32 %v419, 4294901760
    %421 = vmatpush1.msra.mxu0 %v420
    %422 = vmatprep.subr.mxu0 0.0
    %v423 = vand.u32 %v17, 4294901760
    %v424 = vsub.f32 %v17, %v423
    %v425 = vand.u32 %v424, 4294901760
    %426 = vmatpush1.msra.mxu0 %v425
    %427 = vmatprep.subr.mxu0 0.0
    %v428 = vand.u32 %v16, 4294901760
    %v429 = vsub.f32 %v16, %v428
    %v430 = vand.u32 %v429, 4294901760
    %431 = vmatpush1.msra.mxu0 %v430
    %432 = vmatprep.subr.mxu0 0.0
    %433 = vmatpush2.msra.mxu0 0.0
    %434 = vmatprep.subr.mxu0 0.0
    %435 = vmatpush2.msra.mxu0 0.0
    %436 = vmatprep.subr.mxu0 0.0
    %437 = vmatpush2.msra.mxu0 0.0
    %438 = vmatprep.subr.mxu0 0.0
    %439 = vmatpush2.msra.mxu0 0.0
    %440 = vmatprep.subr.mxu0 0.0
    %441 = vmatpush2.msra.mxu0 0.0
    %442 = vmatprep.subr.mxu0 0.0
    %443 = vmatpush2.msra.mxu0 0.0
    %444 = vmatprep.subr.mxu0 0.0
    %445 = vmatpush2.msra.mxu0 0.0
    %446 = vmatprep.subr.mxu0 0.0
    %447 = vmatpush2.msra.mxu0 0.0
    %448 = vmatprep.subr.mxu0 0.0
    %449 = vmatpush2.msra.mxu0 0.0
    %450 = vmatprep.subr.mxu0 0.0
    %451 = vmatpush2.msra.mxu0 0.0
    %452 = vmatprep.subr.mxu0 0.0
    %453 = vmatpush2.msra.mxu0 0.0
    %454 = vmatprep.subr.mxu0 0.0
    %455 = vmatpush2.msra.mxu0 0.0
    %456 = vmatprep.subr.mxu0 0.0
    %457 = vmatpush2.msra.mxu0 0.0
    %458 = vmatprep.subr.mxu0 0.0
    %459 = vmatpush2.msra.mxu0 0.0
    %460 = vmatprep.subr.mxu0 0.0
    %461 = vmatpush2.msra.mxu0 0.0
    %462 = vmatprep.subr.mxu0 0.0
    %463 = vmatpush2.msra.mxu0 0.0
    %464 = vmatprep.mubr.f32.mxu0 0.0
    %v465 = vand.u32 %v31, 4294901760
    %466 = vmatmul.mubr.f32.gmra.mxu0 %v465
    %v467 = vpop.f32.mrf.mxu0
    %v468 = vadd.f32 %v379, %v467
    %v469 = vpop.f32.mrf.mxu0
    %470 = vdwg.mxu0
    %471 = vmatprep.subr.mxu0 0.0
    %472 = vmatpush1.msra.mxu0 0.0
    %473 = vmatprep.subr.mxu0 0.0
    %474 = vmatpush1.msra.mxu0 0.0
    %475 = vmatprep.subr.mxu0 0.0
    %476 = vmatpush1.msra.mxu0 0.0
    %477 = vmatprep.subr.mxu0 0.0
    %478 = vmatpush1.msra.mxu0 0.0
    %479 = vmatprep.subr.mxu0 0.0
    %480 = vmatpush1.msra.mxu0 0.0
    %481 = vmatprep.subr.mxu0 0.0
    %482 = vmatpush1.msra.mxu0 0.0
    %483 = vmatprep.subr.mxu0 0.0
    %484 = vmatpush1.msra.mxu0 0.0
    %485 = vmatprep.subr.mxu0 0.0
    %486 = vmatpush1.msra.mxu0 0.0
    %487 = vmatprep.subr.mxu0 0.0
    %488 = vmatpush1.msra.mxu0 0.0
    %489 = vmatprep.subr.mxu0 0.0
    %490 = vmatpush1.msra.mxu0 0.0
    %491 = vmatprep.subr.mxu0 0.0
    %v492 = vand.u32 %v35, 4294901760
    %493 = vmatpush1.msra.mxu0 %v492
    %494 = vmatprep.subr.mxu0 0.0
    %v495 = vand.u32 %v20, 4294901760
    %496 = vmatpush1.msra.mxu0 %v495
    %497 = vmatprep.subr.mxu0 0.0
    %v498 = vand.u32 %v19, 4294901760
    %499 = vmatpush1.msra.mxu0 %v498
    %500 = vmatprep.subr.mxu0 0.0
    %v501 = vand.u32 %v18, 4294901760
    %502 = vmatpush1.msra.mxu0 %v501
    %503 = vmatprep.subr.mxu0 0.0
    %v504 = vand.u32 %v17, 4294901760
    %505 = vmatpush1.msra.mxu0 %v504
    %506 = vmatprep.subr.mxu0 0.0
    %v507 = vand.u32 %v16, 4294901760
    %508 = vmatpush1.msra.mxu0 %v507
    %509 = vmatprep.subr.mxu0 0.0
    %510 = vmatpush2.msra.mxu0 0.0
    %511 = vmatprep.subr.mxu0 0.0
    %512 = vmatpush2.msra.mxu0 0.0
    %513 = vmatprep.subr.mxu0 0.0
    %514 = vmatpush2.msra.mxu0 0.0
    %515 = vmatprep.subr.mxu0 0.0
    %516 = vmatpush2.msra.mxu0 0.0
    %517 = vmatprep.subr.mxu0 0.0
    %518 = vmatpush2.msra.mxu0 0.0
    %519 = vmatprep.subr.mxu0 0.0
    %520 = vmatpush2.msra.mxu0 0.0
    %521 = vmatprep.subr.mxu0 0.0
    %522 = vmatpush2.msra.mxu0 0.0
    %523 = vmatprep.subr.mxu0 0.0
    %524 = vmatpush2.msra.mxu0 0.0
    %525 = vmatprep.subr.mxu0 0.0
    %526 = vmatpush2.msra.mxu0 0.0
    %527 = vmatprep.subr.mxu0 0.0
    %528 = vmatpush2.msra.mxu0 0.0
    %529 = vmatprep.subr.mxu0 0.0
    %530 = vmatpush2.msra.mxu0 0.0
    %531 = vmatprep.subr.mxu0 0.0
    %532 = vmatpush2.msra.mxu0 0.0
    %533 = vmatprep.subr.mxu0 0.0
    %534 = vmatpush2.msra.mxu0 0.0
    %535 = vmatprep.subr.mxu0 0.0
    %536 = vmatpush2.msra.mxu0 0.0
    %537 = vmatprep.subr.mxu0 0.0
    %538 = vmatpush2.msra.mxu0 0.0
    %539 = vmatprep.subr.mxu0 0.0
    %540 = vmatpush2.msra.mxu0 0.0
    %541 = vmatprep.mubr.f32.mxu0 0.0
    %v542 = vand.u32 %v31, 4294901760
    %543 = vmatmul.mubr.f32.gmra.mxu0 %v542
    %v544 = vpop.f32.mrf.mxu0
    %v545 = vadd.f32 %v468, %v544
    %v546 = vpop.f32.mrf.mxu0
    %547 = vdwg.mxu0
    %548 = vst [vmem:[#allocation2] sm:$0x3] %v545
    // Predicated region
    $region14: #{_mlr_forward.1} parent=1 // pred_check
      _
    $region15: #{_mlr_forward.1} parent=1 // pred_check_branch
      %550 = sbr.rel (0) target = $region17
    $region16: #{_mlr_forward.1} parent=1 // pred_region
      %s552 = ssub.s32 32, 32
      %553 = vsyncadd [#allocation3], %s552
      %s555 = sshll.u32 [#allocation2], 4
      %s556 = int_to_ptr.vmem [resolvable:$true] %s555
      %558 = dma.vmem_to_hbm [thread:$0]  %s556, 32, %s3, [#allocation3]
    $region17: #{_mlr_forward.1} parent=1 // pred_fallthru
      _
    // Predicated region
    $region18: #{_mlr_forward.1} parent=1 // pred_check
      _
    $region19: #{_mlr_forward.1} parent=1 // pred_check_branch
      %560 = sbr.rel (0) target = $region21
    $region20: #{_mlr_forward.1} parent=1 // pred_region
      %561 = dma.done [#allocation3], 32
    $region21: #{_mlr_forward.1} parent=1 // pred_fallthru
      _
    %562 = vsyncpa [#allocation3], 1

</llo_original>
